<compile_context>
chip_gen: v7x
topology: tpu7x:2x2x1
jax: 0.10.0
libtpu: 0.0.40
codegen_flags: <defaults>
</compile_context>

<pallas_src>
import functools

import jax
import jax.numpy as jnp
from jax import lax
from jax.experimental import pallas as pl
from jax.experimental.pallas import tpu as pltpu


def _dice_kernel(x_ref, t_ref, inter_ref, psum_ref, tsum_ref, *,
                 hw, tile_lanes, tiles_per_core, need_mask):
    n = pl.program_id(1)   # sample index (reduction axis)
    l = pl.program_id(2)   # pixel-tile index within this core's range

    # Per-core accumulators live directly in the (resident) output blocks.
    @pl.when(jnp.logical_and(n == 0, l == 0))
    def _init():
        inter_ref[...] = jnp.zeros_like(inter_ref)
        psum_ref[...] = jnp.zeros_like(psum_ref)
        tsum_ref[...] = jnp.zeros_like(tsum_ref)

    x = x_ref[...].astype(jnp.float32)   # (C, TL): channels on sublanes
    t = t_ref[...].astype(jnp.float32)   # pixels on lanes

    # Numerically stable softmax over channels = small sublane reduction.
    m = jnp.max(x, axis=0, keepdims=True)            # (1, TL)
    e = jnp.exp(x - m)                               # EUP
    s = jnp.sum(e, axis=0, keepdims=True)            # (1, TL)
    inv = pl.reciprocal(s, approx=True)              # EUP vrcp
    inv = inv * (2.0 - s * inv)                      # one Newton step -> ~f32 exact
    p = e * inv                                      # (C, TL) probabilities

    if need_mask:
        # Mask lanes past the real pixel count (boundary / phantom tiles).
        g = pl.program_id(0)
        start = (g * tiles_per_core + l) * tile_lanes
        lane = lax.broadcasted_iota(jnp.int32, p.shape, 1)
        valid = (start + lane) < hw
        p = jnp.where(valid, p, 0.0)
        t = jnp.where(valid, t, 0.0)

    # Per-channel partial sums over this pixel tile (lane reductions).
    # sum(p + t) == sum(p) + sum(t), so no full-tile p+t temporary is needed.
    inter_ref[...] += jnp.sum(p * t, axis=1, keepdims=True)   # (C, 1)
    psum_ref[...] += jnp.sum(p, axis=1, keepdims=True)        # (C, 1)
    tsum_ref[...] += jnp.sum(t, axis=1, keepdims=True)        # (C, 1)


def dice_loss(output, target, *, tile_lanes=32768, num_parallel=2):
    """output, target: (N, C, *spatial) arrays of identical shape. Returns scalar."""
    assert output.shape == target.shape, \
        "'input' and 'target' must have the same shape"
    N, C = output.shape[0], output.shape[1]
    hw = 1
    for d in output.shape[2:]:
        hw *= d

    # Free reshape: NC(spatial) is already contiguous as (N, C, HW) — no transpose.
    x3 = output.reshape(N, C, hw)
    t3 = target.reshape(N, C, hw)

    if hw <= tile_lanes:
        tl = hw                                       # full extent: always legal
    else:
        tl = max(128, (tile_lanes // 128) * 128)      # lane tile, multiple of 128
    num_tiles = pl.cdiv(hw, tl)
    g = max(1, min(num_parallel, num_tiles))          # 2-way split -> both v7x TCs
    tiles_per_core = pl.cdiv(num_tiles, g)
    need_mask = (g * tiles_per_core * tl) != hw

    def in_map(gi, ni, li):
        tile = gi * tiles_per_core + li
        # Clamp phantom tiles (fully masked in-kernel) to a valid block index.
        return (ni, 0, jnp.minimum(tile, num_tiles - 1))

    def out_map(gi, ni, li):
        return (gi, 0, 0)

    kernel = functools.partial(
        _dice_kernel, hw=hw, tile_lanes=tl,
        tiles_per_core=tiles_per_core, need_mask=need_mask)

    part_shape = jax.ShapeDtypeStruct((g, C, 1), jnp.float32)
    inter, psum, tsum = pl.pallas_call(
        kernel,
        out_shape=(part_shape, part_shape, part_shape),
        grid_spec=pltpu.PrefetchScalarGridSpec(
            num_scalar_prefetch=0,
            grid=(g, N, tiles_per_core),
            in_specs=[
                pl.BlockSpec((None, C, tl), in_map),
                pl.BlockSpec((None, C, tl), in_map),
            ],
            out_specs=[
                pl.BlockSpec((None, C, 1), out_map),
                pl.BlockSpec((None, C, 1), out_map),
                pl.BlockSpec((None, C, 1), out_map),
            ],
        ),
        compiler_params=pltpu.CompilerParams(
            dimension_semantics=("parallel", "arbitrary", "arbitrary"),
        ),
    )(x3, t3)

    intersect = jnp.sum(inter[:, :, 0], axis=0)                    # (C,)
    denominator = jnp.sum(psum[:, :, 0] + tsum[:, :, 0], axis=0)   # (C,)
    dice = intersect / denominator
    # NOTE: the PyTorch module defines self.epsilon but never uses it in
    # forward(), so we intentionally do not add it either.
    return 1.0 - jnp.mean(dice)


def dice_loss_ref(output, target):
    """Pure-JAX reference mirroring the PyTorch module."""
    p = jax.nn.softmax(output, axis=1)
    C = output.shape[1]
    perm = (1, 0) + tuple(range(2, output.ndim))
    pf = jnp.transpose(p, perm).reshape(C, -1)
    tf = jnp.transpose(target, perm).reshape(C, -1)
    intersect = jnp.sum(pf * tf, axis=-1)
    denominator = jnp.sum(pf + tf, axis=-1)
    return 1.0 - jnp.mean(intersect / denominator)


if __name__ == "__main__":
    key = jax.random.PRNGKey(0)
    k1, k2, k3, k4 = jax.random.split(key, 4)

    # Main shape: N=2, C=4, H=W=16  (single-tile path).
    logits = jax.random.normal(k1, (2, 4, 16, 16), dtype=jnp.float32)
    # Soft targets in [0, 1): keeps the denominator strictly positive.
    target = jax.random.uniform(k2, (2, 4, 16, 16), dtype=jnp.float32)

    loss = jax.block_until_ready(dice_loss(logits, target))
    ref = jax.block_until_ready(dice_loss_ref(logits, target))
    assert jnp.allclose(loss, ref, atol=1e-5, rtol=1e-5), (loss, ref)

    # Exercise the 2-way "parallel" split (v7x dual-TensorCore path) with tiny tiles.
    loss2 = jax.block_until_ready(dice_loss(logits, target, tile_lanes=128))
    assert jnp.allclose(loss2, ref, atol=1e-5, rtol=1e-5), (loss2, ref)

    # Exercise the masked (non-divisible pixel count) path: HW = 200, C = 3.
    logits3 = jax.random.normal(k3, (1, 3, 10, 20), dtype=jnp.float32)
    target3 = jax.random.uniform(k4, (1, 3, 10, 20), dtype=jnp.float32)
    loss3 = jax.block_until_ready(dice_loss(logits3, target3, tile_lanes=128))
    ref3 = jax.block_until_ready(dice_loss_ref(logits3, target3))
    assert jnp.allclose(loss3, ref3, atol=1e-5, rtol=1e-5), (loss3, ref3)

    print("KERNEL_OK")
</pallas_src>

<mosaic_0001>
module attributes {stable_mosaic.version = 11 : i64} {
  func.func @_dice_kernel(%arg0: i32, %arg1: i32, %arg2: i32, %arg3: memref<1x4x256xf32, #tpu.memory_space<vmem>>, %arg4: memref<1x4x256xf32, #tpu.memory_space<vmem>>, %arg5: memref<1x4x1xf32, #tpu.memory_space<vmem>>, %arg6: memref<1x4x1xf32, #tpu.memory_space<vmem>>, %arg7: memref<1x4x1xf32, #tpu.memory_space<vmem>>) attributes {dimension_semantics = [#tpu.dimension_semantics<parallel>, #tpu.dimension_semantics<arbitrary>, #tpu.dimension_semantics<arbitrary>], iteration_bounds = array<i64: 1, 2, 1>, scalar_prefetch = 0 : i64, scratch_operands = 0 : i64, tpu.core_type = #tpu.core_type<tc>, window_params = [{transform_indices = @transform_0, window_bounds = array<i64: 1, 4, 256>}, {transform_indices = @transform_1, window_bounds = array<i64: 1, 4, 256>}, {transform_indices = @transform_2, window_bounds = array<i64: 1, 4, 1>}, {transform_indices = @transform_3, window_bounds = array<i64: 1, 4, 1>}, {transform_indices = @transform_4, window_bounds = array<i64: 1, 4, 1>}]} {
    %c0_i32 = arith.constant 0 : i32
    %0 = arith.cmpi eq, %arg1, %c0_i32 : i32
    %c0_i32_0 = arith.constant 0 : i32
    %1 = arith.cmpi eq, %arg2, %c0_i32_0 : i32
    %2 = arith.andi %0, %1 : i1
    %3 = arith.extui %2 : i1 to i32
    %c0_i32_1 = arith.constant 0 : i32
    %4 = arith.cmpi ne, %3, %c0_i32_1 : i32
    scf.if %4 {
      %cst_30 = arith.constant 0.000000e+00 : f32
      %48 = vector.broadcast %cst_30 : f32 to vector<4x1xf32>
      %c0_31 = arith.constant 0 : index
      %c0_32 = arith.constant 0 : index
      %c0_33 = arith.constant 0 : index
      %49 = vector.load %arg5[%c0_31, %c0_32, %c0_33] : memref<1x4x1xf32, #tpu.memory_space<vmem>>, vector<1x4x1xf32>
      %50 = vector.shape_cast %49 : vector<1x4x1xf32> to vector<4x1xf32>
      %51 = vector.shape_cast %48 : vector<4x1xf32> to vector<1x4x1xf32>
      tpu.vector_store %arg5[%c0_31, %c0_32, %c0_33], %51 {strides = array<i32>} : memref<1x4x1xf32, #tpu.memory_space<vmem>>, vector<1x4x1xf32>,
      %cst_34 = arith.constant 0.000000e+00 : f32
      %52 = vector.broadcast %cst_34 : f32 to vector<4x1xf32>
      %c0_35 = arith.constant 0 : index
      %c0_36 = arith.constant 0 : index
      %c0_37 = arith.constant 0 : index
      %53 = vector.load %arg6[%c0_35, %c0_36, %c0_37] : memref<1x4x1xf32, #tpu.memory_space<vmem>>, vector<1x4x1xf32>
      %54 = vector.shape_cast %53 : vector<1x4x1xf32> to vector<4x1xf32>
      %55 = vector.shape_cast %52 : vector<4x1xf32> to vector<1x4x1xf32>
      tpu.vector_store %arg6[%c0_35, %c0_36, %c0_37], %55 {strides = array<i32>} : memref<1x4x1xf32, #tpu.memory_space<vmem>>, vector<1x4x1xf32>,
      %cst_38 = arith.constant 0.000000e+00 : f32
      %56 = vector.broadcast %cst_38 : f32 to vector<4x1xf32>
      %c0_39 = arith.constant 0 : index
      %c0_40 = arith.constant 0 : index
      %c0_41 = arith.constant 0 : index
      %57 = vector.load %arg7[%c0_39, %c0_40, %c0_41] : memref<1x4x1xf32, #tpu.memory_space<vmem>>, vector<1x4x1xf32>
      %58 = vector.shape_cast %57 : vector<1x4x1xf32> to vector<4x1xf32>
      %59 = vector.shape_cast %56 : vector<4x1xf32> to vector<1x4x1xf32>
      tpu.vector_store %arg7[%c0_39, %c0_40, %c0_41], %59 {strides = array<i32>} : memref<1x4x1xf32, #tpu.memory_space<vmem>>, vector<1x4x1xf32>,
    } else {
    }
    %c0 = arith.constant 0 : index
    %c0_2 = arith.constant 0 : index
    %c0_3 = arith.constant 0 : index
    %5 = vector.load %arg3[%c0, %c0_2, %c0_3] : memref<1x4x256xf32, #tpu.memory_space<vmem>>, vector<1x4x256xf32>
    %6 = vector.shape_cast %5 : vector<1x4x256xf32> to vector<4x256xf32>
    %c0_4 = arith.constant 0 : index
    %c0_5 = arith.constant 0 : index
    %c0_6 = arith.constant 0 : index
    %7 = vector.load %arg4[%c0_4, %c0_5, %c0_6] : memref<1x4x256xf32, #tpu.memory_space<vmem>>, vector<1x4x256xf32>
    %8 = vector.shape_cast %7 : vector<1x4x256xf32> to vector<4x256xf32>
    %cst = arith.constant dense<0xFF800000> : vector<256xf32>
    %9 = vector.multi_reduction <maximumf>, %6, %cst [0] : vector<4x256xf32> to vector<256xf32>
    %10 = vector.shape_cast %9 : vector<256xf32> to vector<1x256xf32>
    %11 = vector.broadcast %10 : vector<1x256xf32> to vector<4x256xf32>
    %12 = arith.subf %6, %11 : vector<4x256xf32>
    %13 = math.exp %12 : vector<4x256xf32>
    %cst_7 = arith.constant dense<0.000000e+00> : vector<256xf32>
    %14 = vector.multi_reduction <add>, %13, %cst_7 [0] : vector<4x256xf32> to vector<256xf32>
    %15 = vector.shape_cast %14 : vector<256xf32> to vector<1x256xf32>
    %16 = tpu.reciprocal %15 {approx = true} : vector<1x256xf32> -> vector<1x256xf32>
    %17 = arith.mulf %15, %16 : vector<1x256xf32>
    %cst_8 = arith.constant 2.000000e+00 : f32
    %18 = vector.broadcast %cst_8 : f32 to vector<1x256xf32>
    %19 = arith.subf %18, %17 : vector<1x256xf32>
    %20 = arith.mulf %16, %19 : vector<1x256xf32>
    %21 = vector.broadcast %20 : vector<1x256xf32> to vector<4x256xf32>
    %22 = arith.mulf %13, %21 : vector<4x256xf32>
    %c0_9 = arith.constant 0 : index
    %c0_10 = arith.constant 0 : index
    %c0_11 = arith.constant 0 : index
    %23 = vector.load %arg5[%c0_9, %c0_10, %c0_11] : memref<1x4x1xf32, #tpu.memory_space<vmem>>, vector<1x4x1xf32>
    %24 = vector.shape_cast %23 : vector<1x4x1xf32> to vector<4x1xf32>
    %25 = arith.mulf %22, %8 : vector<4x256xf32>
    %cst_12 = arith.constant dense<0.000000e+00> : vector<4xf32>
    %26 = vector.multi_reduction <add>, %25, %cst_12 [1] : vector<4x256xf32> to vector<4xf32>
    %27 = vector.shape_cast %26 : vector<4xf32> to vector<4x1xf32>
    %28 = arith.addf %24, %27 : vector<4x1xf32>
    %c0_13 = arith.constant 0 : index
    %c0_14 = arith.constant 0 : index
    %c0_15 = arith.constant 0 : index
    %29 = vector.load %arg5[%c0_13, %c0_14, %c0_15] : memref<1x4x1xf32, #tpu.memory_space<vmem>>, vector<1x4x1xf32>
    %30 = vector.shape_cast %29 : vector<1x4x1xf32> to vector<4x1xf32>
    %31 = vector.shape_cast %28 : vector<4x1xf32> to vector<1x4x1xf32>
    tpu.vector_store %arg5[%c0_13, %c0_14, %c0_15], %31 {strides = array<i32>} : memref<1x4x1xf32, #tpu.memory_space<vmem>>, vector<1x4x1xf32>,
    %c0_16 = arith.constant 0 : index
    %c0_17 = arith.constant 0 : index
    %c0_18 = arith.constant 0 : index
    %32 = vector.load %arg6[%c0_16, %c0_17, %c0_18] : memref<1x4x1xf32, #tpu.memory_space<vmem>>, vector<1x4x1xf32>
    %33 = vector.shape_cast %32 : vector<1x4x1xf32> to vector<4x1xf32>
    %cst_19 = arith.constant dense<0.000000e+00> : vector<4xf32>
    %34 = vector.multi_reduction <add>, %22, %cst_19 [1] : vector<4x256xf32> to vector<4xf32>
    %35 = vector.shape_cast %34 : vector<4xf32> to vector<4x1xf32>
    %36 = arith.addf %33, %35 : vector<4x1xf32>
    %c0_20 = arith.constant 0 : index
    %c0_21 = arith.constant 0 : index
    %c0_22 = arith.constant 0 : index
    %37 = vector.load %arg6[%c0_20, %c0_21, %c0_22] : memref<1x4x1xf32, #tpu.memory_space<vmem>>, vector<1x4x1xf32>
    %38 = vector.shape_cast %37 : vector<1x4x1xf32> to vector<4x1xf32>
    %39 = vector.shape_cast %36 : vector<4x1xf32> to vector<1x4x1xf32>
    tpu.vector_store %arg6[%c0_20, %c0_21, %c0_22], %39 {strides = array<i32>} : memref<1x4x1xf32, #tpu.memory_space<vmem>>, vector<1x4x1xf32>,
    %c0_23 = arith.constant 0 : index
    %c0_24 = arith.constant 0 : index
    %c0_25 = arith.constant 0 : index
    %40 = vector.load %arg7[%c0_23, %c0_24, %c0_25] : memref<1x4x1xf32, #tpu.memory_space<vmem>>, vector<1x4x1xf32>
    %41 = vector.shape_cast %40 : vector<1x4x1xf32> to vector<4x1xf32>
    %cst_26 = arith.constant dense<0.000000e+00> : vector<4xf32>
    %42 = vector.multi_reduction <add>, %8, %cst_26 [1] : vector<4x256xf32> to vector<4xf32>
    %43 = vector.shape_cast %42 : vector<4xf32> to vector<4x1xf32>
    %44 = arith.addf %41, %43 : vector<4x1xf32>
    %c0_27 = arith.constant 0 : index
    %c0_28 = arith.constant 0 : index
    %c0_29 = arith.constant 0 : index
    %45 = vector.load %arg7[%c0_27, %c0_28, %c0_29] : memref<1x4x1xf32, #tpu.memory_space<vmem>>, vector<1x4x1xf32>
    %46 = vector.shape_cast %45 : vector<1x4x1xf32> to vector<4x1xf32>
    %47 = vector.shape_cast %44 : vector<4x1xf32> to vector<1x4x1xf32>
    tpu.vector_store %arg7[%c0_27, %c0_28, %c0_29], %47 {strides = array<i32>} : memref<1x4x1xf32, #tpu.memory_space<vmem>>, vector<1x4x1xf32>,
    return
  }
  func.func @transform_0(%arg0: i32, %arg1: i32, %arg2: i32) -> (i32, i32, i32) {
    %c1_i32 = arith.constant 1 : i32
    %0 = arith.muli %arg0, %c1_i32 : i32
    %1 = arith.addi %0, %arg2 : i32
    %c0_i32 = arith.constant 0 : i32
    %2 = arith.minsi %1, %c0_i32 : i32
    %c0_i32_0 = arith.constant 0 : i32
    %c0_i32_1 = arith.constant 0 : i32
    return %arg1, %c0_i32_0, %2 : i32, i32, i32
  }
  func.func @transform_1(%arg0: i32, %arg1: i32, %arg2: i32) -> (i32, i32, i32) {
    %c1_i32 = arith.constant 1 : i32
    %0 = arith.muli %arg0, %c1_i32 : i32
    %1 = arith.addi %0, %arg2 : i32
    %c0_i32 = arith.constant 0 : i32
    %2 = arith.minsi %1, %c0_i32 : i32
    %c0_i32_0 = arith.constant 0 : i32
    %c0_i32_1 = arith.constant 0 : i32
    return %arg1, %c0_i32_0, %2 : i32, i32, i32
  }
  func.func @transform_2(%arg0: i32, %arg1: i32, %arg2: i32) -> (i32, i32, i32) {
    %c0_i32 = arith.constant 0 : i32
    %c0_i32_0 = arith.constant 0 : i32
    %c0_i32_1 = arith.constant 0 : i32
    return %arg0, %c0_i32, %c0_i32_0 : i32, i32, i32
  }
  func.func @transform_3(%arg0: i32, %arg1: i32, %arg2: i32) -> (i32, i32, i32) {
    %c0_i32 = arith.constant 0 : i32
    %c0_i32_0 = arith.constant 0 : i32
    %c0_i32_1 = arith.constant 0 : i32
    return %arg0, %c0_i32, %c0_i32_0 : i32, i32, i32
  }
  func.func @transform_4(%arg0: i32, %arg1: i32, %arg2: i32) -> (i32, i32, i32) {
    %c0_i32 = arith.constant 0 : i32
    %c0_i32_0 = arith.constant 0 : i32
    %c0_i32_1 = arith.constant 0 : i32
    return %arg0, %c0_i32, %c0_i32_0 : i32, i32, i32
  }
}

</mosaic_0001>

<llo_original>
// kernel: tpu_custom_call.1
$region0: #{tpu_custom_call.1}
  #allocation0 [shape = 'u32[]', space=smem, size = 0x4, offset = 0x4, fixed_abs, tag = 'smem constant byte address 0x4 - core index']
  #allocation1 [shape = 'u32[144,128]{1,0:T(1,128)}', space=vmem, size = 0x12000, scoped, tag = 'internal scratch']
  %s0 = inlined_call_operand.hbm [shape: f32[2,4,256], index: 0, kind: input, shape index: {}]
  %s1 = inlined_call_operand.hbm [shape: f32[2,4,256], index: 1, kind: input, shape index: {}]
  %s2 = inlined_call_operand.vmem [shape: f32[1,4,1], index: 2, kind: output, shape index: {0}]
  %s3 = inlined_call_operand.vmem [shape: f32[1,4,1], index: 3, kind: output, shape index: {1}]
  %s4 = inlined_call_operand.vmem [shape: f32[1,4,1], index: 4, kind: output, shape index: {2}]
  %5 = xla_tuple %s2, %s3, %s4
  %s6 = sld [smem:[#allocation0]]
  $region69: #{tpu_custom_call.1} parent=0
    _
  %s8 = ssub.s32 1, %s6
  %s9 = scalar_select 0, %s8, %s6
  $region1: #{tpu_custom_call.1} parent=0
    #allocation2 [shape = 'u8[8192]{0}', space=vmem, size = 0x2000, scoped, tag = 'input window, operand 0']
    #allocation3 [shape = 's32[2]{0}', space=sflag, size = 0x8, scoped, tag = 'scoped memory for tpu_custom_call.1']
    #allocation4 [shape = 'u8[8192]{0}', space=vmem, size = 0x2000, scoped, tag = 'input window, operand 1']
    #allocation5 [shape = 's32[2]{0}', space=sflag, size = 0x8, scoped, tag = 'scoped memory for tpu_custom_call.1']
    %10 = vsyncpa [#allocation3], 0
    %s11 = scalar_lea.sflag [#allocation3], 1
    %12 = vsyncpa %s11, 0
    %13 = vsyncpa [#allocation5], 0
    %s14 = scalar_lea.sflag [#allocation5], 1
    %15 = vsyncpa %s14, 0
    loop: start=0, step=1, limit=4
    $region2: #{tpu_custom_call.1} parent=1 // loop_pre_header
      _
    $region3: #{tpu_custom_call.1} parent=1 // loop_header
      %s17 = sphi 0, %s21
      %p18 = scmp.ge.s32.totalorder %s17, 4
      %s24 = sphi 0, %s43
      %s25 = sphi 0, %s39
      %s26 = sphi 0, %s35
      %s27 = sphi 0, %s24
      %s28 = sphi 0, %s25
      %s29 = sphi 0, %s26
      %s30 = sphi 0, %s27
      %s31 = sphi 0, %s28
      %s32 = sphi 0, %s29
      %s54 = sphi 0, %s56
      %s57 = sphi 0, %s54
      %s58 = sphi 0, %s57
      %s74 = sphi 0, %s58
      %s88 = sphi 0, %s90
      %s91 = sphi 0, %s88
      %s92 = sphi 0, %s91
      %s108 = sphi 0, %s92
      %s114 = sphi 0, %s116
      %s117 = sphi 0, %s114
      %s118 = sphi 0, %s117
      %s134 = sphi 0, %s118
      %s140 = sphi 0, %s142
      %s143 = sphi 0, %s140
      %s144 = sphi 0, %s143
      %s160 = sphi 0, %s144
      %s166 = sphi 0, %s168
      %s169 = sphi 0, %s166
      %s170 = sphi 0, %s169
      %s186 = sphi 0, %s170
    $region4: #{tpu_custom_call.1} parent=1 // loop_header_branch
      %20 = sbr.rel (%p18) target = $region8
    $region5: #{tpu_custom_call.1} parent=1 // loop_body
      %s22 = ssub.s32 %s17, 1
      %s23 = ssub.s32 %s17, 2
      %s33 = sadd.s32 1, %s26
      %p34 = scmp.ge.s32.totalorder %s33, 1
      %s35 = scalar_select %p34, 0, %s33
      %s36 = sadd.s32 1, %s25
      %s37 = scalar_select %p34, %s36, %s25
      %p38 = scmp.ge.s32.totalorder %s37, 2
      %s39 = scalar_select %p38, 0, %s37
      %s40 = sadd.s32 1, %s24
      %s41 = scalar_select %p38, %s40, %s24
      %p42 = scmp.ge.s32.totalorder %s41, 1
      %s43 = scalar_select %p42, 0, %s41
      %s44 = sadd.s32 %s24, %s26
      %p45 = scmp.lt.s32.totalorder %s44, 0
      %s46 = scalar_select %p45, %s44, 0
      %s47 = sadd.s32 %s43, %s35
      %p48 = scmp.lt.s32.totalorder %s47, 0
      %s49 = scalar_select %p48, %s47, 0
      %s50 = ssub.s32 %s25, %s39
      %s51 = ssub.s32 %s46, %s49
      %s52 = sor.u32 %s50, %s51
      %p53 = scmp.eq.s32.totalorder %s52, 0
      %s55 = sadd.s32 %s54, 1
      %s56 = scalar_select %p53, %s54, %s55
      %p59 = pneg %p53
      %p60 = scmp.eq.s32.totalorder %s17, 1
      %p61 = por %p59, %p60
      %p62 = scmp.ne.s32.totalorder %s54, %s57
      %p63 = scmp.eq.s32.totalorder %s17, 0
      %p64 = por %p62, %p63
      %p65 = scmp.ne.s32.totalorder %s54, %s57
      %p66 = scmp.eq.s32.totalorder %s22, 1
      %p67 = por %p65, %p66
      %p68 = scmp.ne.s32.totalorder %s57, %s58
      %p69 = scmp.eq.s32.totalorder %s22, 0
      %p70 = por %p68, %p69
      %p71 = scmp.ne.s32.totalorder %s57, %s58
      %p72 = scmp.eq.s32.totalorder %s23, 1
      %p73 = por %p71, %p72
      %p75 = scmp.ne.s32.totalorder %s58, %s74
      %p76 = scmp.eq.s32.totalorder %s23, 0
      %p77 = por %p75, %p76
      %s78 = sadd.s32 %s24, %s26
      %p79 = scmp.lt.s32.totalorder %s78, 0
      %s80 = scalar_select %p79, %s78, 0
      %s81 = sadd.s32 %s43, %s35
      %p82 = scmp.lt.s32.totalorder %s81, 0
      %s83 = scalar_select %p82, %s81, 0
      %s84 = ssub.s32 %s25, %s39
      %s85 = ssub.s32 %s80, %s83
      %s86 = sor.u32 %s84, %s85
      %p87 = scmp.eq.s32.totalorder %s86, 0
      %s89 = sadd.s32 %s88, 1
      %s90 = scalar_select %p87, %s88, %s89
      %p93 = pneg %p87
      %p94 = scmp.eq.s32.totalorder %s17, 1
      %p95 = por %p93, %p94
      %p96 = scmp.ne.s32.totalorder %s88, %s91
      %p97 = scmp.eq.s32.totalorder %s17, 0
      %p98 = por %p96, %p97
      %p99 = scmp.ne.s32.totalorder %s88, %s91
      %p100 = scmp.eq.s32.totalorder %s22, 1
      %p101 = por %p99, %p100
      %p102 = scmp.ne.s32.totalorder %s91, %s92
      %p103 = scmp.eq.s32.totalorder %s22, 0
      %p104 = por %p102, %p103
      %p105 = scmp.ne.s32.totalorder %s91, %s92
      %p106 = scmp.eq.s32.totalorder %s23, 1
      %p107 = por %p105, %p106
      %p109 = scmp.ne.s32.totalorder %s92, %s108
      %p110 = scmp.eq.s32.totalorder %s23, 0
      %p111 = por %p109, %p110
      %s112 = ssub.s32 %s24, %s43
      %p113 = scmp.eq.s32.totalorder %s112, 0
      %s115 = sadd.s32 %s114, 1
      %s116 = scalar_select %p113, %s114, %s115
      %p119 = pneg %p113
      %p120 = scmp.eq.s32.totalorder %s17, 1
      %p121 = por %p119, %p120
      %p122 = scmp.ne.s32.totalorder %s114, %s117
      %p123 = scmp.eq.s32.totalorder %s17, 0
      %p124 = por %p122, %p123
      %p125 = scmp.ne.s32.totalorder %s114, %s117
      %p126 = scmp.eq.s32.totalorder %s22, 1
      %p127 = por %p125, %p126
      %p128 = scmp.ne.s32.totalorder %s117, %s118
      %p129 = scmp.eq.s32.totalorder %s22, 0
      %p130 = por %p128, %p129
      %p131 = scmp.ne.s32.totalorder %s117, %s118
      %p132 = scmp.eq.s32.totalorder %s23, 1
      %p133 = por %p131, %p132
      %p135 = scmp.ne.s32.totalorder %s118, %s134
      %p136 = scmp.eq.s32.totalorder %s23, 0
      %p137 = por %p135, %p136
      %s138 = ssub.s32 %s24, %s43
      %p139 = scmp.eq.s32.totalorder %s138, 0
      %s141 = sadd.s32 %s140, 1
      %s142 = scalar_select %p139, %s140, %s141
      %p145 = pneg %p139
      %p146 = scmp.eq.s32.totalorder %s17, 1
      %p147 = por %p145, %p146
      %p148 = scmp.ne.s32.totalorder %s140, %s143
      %p149 = scmp.eq.s32.totalorder %s17, 0
      %p150 = por %p148, %p149
      %p151 = scmp.ne.s32.totalorder %s140, %s143
      %p152 = scmp.eq.s32.totalorder %s22, 1
      %p153 = por %p151, %p152
      %p154 = scmp.ne.s32.totalorder %s143, %s144
      %p155 = scmp.eq.s32.totalorder %s22, 0
      %p156 = por %p154, %p155
      %p157 = scmp.ne.s32.totalorder %s143, %s144
      %p158 = scmp.eq.s32.totalorder %s23, 1
      %p159 = por %p157, %p158
      %p161 = scmp.ne.s32.totalorder %s144, %s160
      %p162 = scmp.eq.s32.totalorder %s23, 0
      %p163 = por %p161, %p162
      %s164 = ssub.s32 %s24, %s43
      %p165 = scmp.eq.s32.totalorder %s164, 0
      %s167 = sadd.s32 %s166, 1
      %s168 = scalar_select %p165, %s166, %s167
      %p171 = pneg %p165
      %p172 = scmp.eq.s32.totalorder %s17, 1
      %p173 = por %p171, %p172
      %p174 = scmp.ne.s32.totalorder %s166, %s169
      %p175 = scmp.eq.s32.totalorder %s17, 0
      %p176 = por %p174, %p175
      %p177 = scmp.ne.s32.totalorder %s166, %s169
      %p178 = scmp.eq.s32.totalorder %s22, 1
      %p179 = por %p177, %p178
      %p180 = scmp.ne.s32.totalorder %s169, %s170
      %p181 = scmp.eq.s32.totalorder %s22, 0
      %p182 = por %p180, %p181
      %p183 = scmp.ne.s32.totalorder %s169, %s170
      %p184 = scmp.eq.s32.totalorder %s23, 1
      %p185 = por %p183, %p184
      %p187 = scmp.ne.s32.totalorder %s170, %s186
      %p188 = scmp.eq.s32.totalorder %s23, 0
      %p189 = por %p187, %p188
      %p190 = scmp.le.s32.totalorder 1, %s17
      %p191 = scmp.lt.s32.totalorder %s17, 3
      %p192 = pnand %p190, %p191
      %p193 = pneg %p192
      // Predicated region
      $region9: #{tpu_custom_call.1} parent=5 // pred_check
        _
      $region10: #{tpu_custom_call.1} parent=5 // pred_check_branch
        %195 = sbr.rel (%p192) target = $region12
      $region11: #{tpu_custom_call.1} parent=5 // pred_region
        %s196 = ssub.s32 %s17, 1
      $region12: #{tpu_custom_call.1} parent=5 // pred_fallthru
        _
      %p197 = scmp.lt.s32.totalorder %s17, 2
      // Predicated region
      $region13: #{tpu_custom_call.1} parent=5 // pred_check
        %p198 = pneg %p197
      $region14: #{tpu_custom_call.1} parent=5 // pred_check_branch
        %200 = sbr.rel (%p198) target = $region16
      $region15: #{tpu_custom_call.1} parent=5 // pred_region
        // Predicated region
        $region17: #{tpu_custom_call.1} parent=15 // pred_check
          %p201 = pneg %p64
        $region18: #{tpu_custom_call.1} parent=15 // pred_check_branch
          %203 = sbr.rel (%p201) target = $region20
        $region19: #{tpu_custom_call.1} parent=15 // pred_region
          %s204 = sand.u32 %s54, 1
          %s205 = scalar_lea.sflag [#allocation3], %s204
          %s206 = sand.u32 %s54, 1
          %s207 = smul.addr %s206, 8
          %s208 = scalar_lea.vmem [#allocation2], %s207
          %s209 = sadd.s32 %s24, %s26
          %p210 = scmp.lt.s32.totalorder %s209, 0
          %s211 = scalar_select %p210, %s209, 0
          %s212 = smul.u32 2, %s211
          %s214 = ssub.s32 128, 128
          %215 = vsyncadd %s205, %s214
          %s216 = smul.addr %s25, 2
          %s217 = sadd.s32 %s212, %s216
          %s218 = smul.addr %s217, 64
          %s219 = scalar_lea.hbm %s0, %s218
          %s221 = sshll.u32 %s208, 4
          %s222 = int_to_ptr.vmem [resolvable:$true] %s221
          %224 = dma.hbm_to_vmem [thread:$0]  %s219, 128, %s222, %s205
        $region20: #{tpu_custom_call.1} parent=15 // pred_fallthru
          _
        // Predicated region
        $region21: #{tpu_custom_call.1} parent=15 // pred_check
          %p225 = pneg %p98
        $region22: #{tpu_custom_call.1} parent=15 // pred_check_branch
          %227 = sbr.rel (%p225) target = $region24
        $region23: #{tpu_custom_call.1} parent=15 // pred_region
          %s228 = sand.u32 %s88, 1
          %s229 = scalar_lea.sflag [#allocation5], %s228
          %s230 = sand.u32 %s88, 1
          %s231 = smul.addr %s230, 8
          %s232 = scalar_lea.vmem [#allocation4], %s231
          %s233 = sadd.s32 %s24, %s26
          %p234 = scmp.lt.s32.totalorder %s233, 0
          %s235 = scalar_select %p234, %s233, 0
          %s236 = smul.u32 2, %s235
          %s238 = ssub.s32 128, 128
          %239 = vsyncadd %s229, %s238
          %s240 = smul.addr %s25, 2
          %s241 = sadd.s32 %s236, %s240
          %s242 = smul.addr %s241, 64
          %s243 = scalar_lea.hbm %s1, %s242
          %s245 = sshll.u32 %s232, 4
          %s246 = int_to_ptr.vmem [resolvable:$true] %s245
          %248 = dma.hbm_to_vmem [thread:$0]  %s243, 128, %s246, %s229
        $region24: #{tpu_custom_call.1} parent=15 // pred_fallthru
          _
      $region16: #{tpu_custom_call.1} parent=5 // pred_fallthru
        _
      %p249 = scmp.le.s32.totalorder 1, %s17
      %p250 = scmp.lt.s32.totalorder %s17, 3
      %p251 = pnand %p249, %p250
      %p252 = pneg %p251
      // Predicated region
      $region25: #{tpu_custom_call.1} parent=5 // pred_check
        _
      $region26: #{tpu_custom_call.1} parent=5 // pred_check_branch
        %254 = sbr.rel (%p251) target = $region28
      $region27: #{tpu_custom_call.1} parent=5 // pred_region
        %s255 = ssub.s32 %s17, 1
        %s256 = sand.u32 %s57, 1
        %s257 = scalar_lea.sflag [#allocation3], %s256
        %s258 = sand.u32 %s57, 1
        %s259 = smul.addr %s258, 8
        %s260 = scalar_lea.vmem [#allocation2], %s259
        // Predicated region
        $region29: #{tpu_custom_call.1} parent=27 // pred_check
          %p261 = pneg %p70
        $region30: #{tpu_custom_call.1} parent=27 // pred_check_branch
          %263 = sbr.rel (%p261) target = $region32
        $region31: #{tpu_custom_call.1} parent=27 // pred_region
          %264 = dma.done %s257, 128
        $region32: #{tpu_custom_call.1} parent=27 // pred_fallthru
          _
        %s265 = sand.u32 %s91, 1
        %s266 = scalar_lea.sflag [#allocation5], %s265
        %s267 = sand.u32 %s91, 1
        %s268 = smul.addr %s267, 8
        %s269 = scalar_lea.vmem [#allocation4], %s268
        // Predicated region
        $region33: #{tpu_custom_call.1} parent=27 // pred_check
          %p270 = pneg %p104
        $region34: #{tpu_custom_call.1} parent=27 // pred_check_branch
          %272 = sbr.rel (%p270) target = $region36
        $region35: #{tpu_custom_call.1} parent=27 // pred_region
          %273 = dma.done %s266, 128
        $region36: #{tpu_custom_call.1} parent=27 // pred_fallthru
          _
        %s274 = sand.u32 %s57, 1
        %s275 = scalar_lea.sflag [#allocation3], %s274
        %s276 = sand.u32 %s57, 1
        %s277 = smul.addr %s276, 8
        %s278 = scalar_lea.vmem [#allocation2], %s277
        %p279 = pneg %p70
        %p280 = pneg %p67
        %s281 = sand.u32 %s91, 1
        %s282 = scalar_lea.sflag [#allocation5], %s281
        %s283 = sand.u32 %s91, 1
        %s284 = smul.addr %s283, 8
        %s285 = scalar_lea.vmem [#allocation4], %s284
        %p286 = pneg %p104
        %p287 = pneg %p101
        %p288 = pneg %p130
        %p289 = pneg %p127
        %p290 = scmp.lt.s32.totalorder %s27, 0
        %s291 = scalar_select %p290, %s27, 0
        %s292 = smul.addr %s291, 4
        %s293 = scalar_lea.vmem %s2, %s292
        %p294 = pneg %p156
        %p295 = pneg %p153
        %p296 = scmp.lt.s32.totalorder %s27, 0
        %s297 = scalar_select %p296, %s27, 0
        %s298 = smul.addr %s297, 4
        %s299 = scalar_lea.vmem %s3, %s298
        %p300 = pneg %p182
        %p301 = pneg %p179
        %p302 = scmp.lt.s32.totalorder %s27, 0
        %s303 = scalar_select %p302, %s27, 0
        %s304 = smul.addr %s303, 4
        %s305 = scalar_lea.vmem %s4, %s304
        %s306 = sadd.s32 %s27, %s29
        %p307 = scmp.lt.s32.totalorder %s306, 0
        %s308 = scalar_select %p307, %s306, 0
        %s309 = smul.u32 2, %s308
        %s310 = sadd.s32 %s27, %s29
        %p311 = scmp.lt.s32.totalorder %s310, 0
        %s312 = scalar_select %p311, %s310, 0
        %s313 = smul.u32 2, %s312
        %p314 = scmp.lt.s32.totalorder %s27, 0
        %s315 = scalar_select %p314, %s27, 0
        %s316 = smul.addr %s315, 4
        %s317 = scalar_lea.vmem %s2, %s316
        %p318 = scmp.lt.s32.totalorder %s27, 0
        %s319 = scalar_select %p318, %s27, 0
        %s320 = smul.addr %s319, 4
        %s321 = scalar_lea.vmem %s3, %s320
        %p322 = scmp.lt.s32.totalorder %s27, 0
        %s323 = scalar_select %p322, %s27, 0
        %s324 = smul.addr %s323, 4
        %s325 = scalar_lea.vmem %s4, %s324
        %p326 = scmp.eq.s32.totalorder %s28, 0
        %p327 = scmp.eq.s32.totalorder %s29, 0
        %p328 = pnand %p326, %p327
        %p329 = pneg %p328
        // Predicated region
        $region37: #{tpu_custom_call.1} parent=27 // pred_check
          _
        $region38: #{tpu_custom_call.1} parent=27 // pred_check_branch
          %331 = sbr.rel (%p328) target = $region40
        $region39: #{tpu_custom_call.1} parent=27 // pred_region
          %vm332 = vcmask 3072
          %333 = vst.msk [vmem:[%s317] sm:$0xf] %vm332, 0.0
          %334 = vst.msk [vmem:[%s321] sm:$0xf] %vm332, 0.0
          %335 = vst.msk [vmem:[%s325] sm:$0xf] %vm332, 0.0
        $region40: #{tpu_custom_call.1} parent=27 // pred_fallthru
          _
        %v336 = vld [vmem:[%s260] sm:$0xff]
        %v337 = vld [vmem:[%s269] sm:$0xff]
        %v339 = vcombine.high %v336, %v336
        %vm341 = vcmask 1043456
        %v342 = vsel %vm341, %v336, -inf
        %v343 = vrot.slane %v342, 4
        %v344 = vmax.f32 %v342, %v343
        %v345 = vrot.slane %v344, 2
        %v346 = vmax.f32 %v344, %v345
        %v347 = vrot.slane %v346, 1
        %v348 = vmax.f32 %v346, %v347
        %v349 = vsel %vm341, %v339, -inf
        %v350 = vrot.slane %v349, 4
        %v351 = vmax.f32 %v349, %v350
        %v352 = vrot.slane %v351, 2
        %v353 = vmax.f32 %v351, %v352
        %v354 = vrot.slane %v353, 1
        %v355 = vmax.f32 %v353, %v354
        %v358 = vcombine.low %v348, %v355
        %v360 = vsub.f32 %v336, %v358
        %v361 = vmul.f32 %v360, 1.442695
        %v362 = vpow.pop %v361
        %v364 = vcombine.high %v362, %v362
        %v366 = vsel %vm341, %v362, 0.0
        %v367 = vrot.slane %v366, 4
        %v368 = vadd.f32 %v366, %v367
        %v369 = vrot.slane %v368, 2
        %v370 = vadd.f32 %v368, %v369
        %v371 = vrot.slane %v370, 1
        %v372 = vadd.f32 %v370, %v371
        %v373 = vsel %vm341, %v364, 0.0
        %v374 = vrot.slane %v373, 4
        %v375 = vadd.f32 %v373, %v374
        %v376 = vrot.slane %v375, 2
        %v377 = vadd.f32 %v375, %v376
        %v378 = vrot.slane %v377, 1
        %v379 = vadd.f32 %v377, %v378
        %v380 = vrcp.pop %v372
        %v381 = vrcp.pop %v379
        %v382 = vmul.f32 %v372, %v380
        %v383 = vmul.f32 %v379, %v381
        %v384 = vsub.f32 2.0, %v382
        %v385 = vsub.f32 2.0, %v383
        %v386 = vmul.f32 %v380, %v384
        %v387 = vmul.f32 %v381, %v385
        %v390 = vcombine.low %v386, %v387
        %v392 = vmul.f32 %v362, %v390
        %v393 = vld [vmem:[%s317] sm:$0xf]
        %v394 = vmul.f32 %v392, %v337
        %v396 = vcombine.high %v394, %v394
        %v398 = vsel %vm341, %v394, 0.0
        %v399 = vsel %vm341, %v396, 0.0
        %v400 = vadd.f32 %v398, %v399
        %401 = vadd.xlane.f32.xlu0 %v400
        %v402 = vpop.xlane.xlu0 %401
        %v403 = vadd.f32 %v393, %v402
        %vm404 = vcmask 3072
        %405 = vst.msk [vmem:[%s317] sm:$0xf] %vm404, %v403
        %v406 = vld [vmem:[%s321] sm:$0xf]
        %v408 = vcombine.high %v392, %v392
        %v410 = vsel %vm341, %v392, 0.0
        %v411 = vsel %vm341, %v408, 0.0
        %v412 = vadd.f32 %v410, %v411
        %413 = vadd.xlane.f32.xlu0 %v412
        %v414 = vpop.xlane.xlu0 %413
        %v415 = vadd.f32 %v406, %v414
        %416 = vst.msk [vmem:[%s321] sm:$0xf] %vm404, %v415
        %v417 = vld [vmem:[%s325] sm:$0xf]
        %v419 = vcombine.high %v337, %v337
        %v421 = vsel %vm341, %v337, 0.0
        %v422 = vsel %vm341, %v419, 0.0
        %v423 = vadd.f32 %v421, %v422
        %424 = vadd.xlane.f32.xlu0 %v423
        %v425 = vpop.xlane.xlu0 %424
        %v426 = vadd.f32 %v417, %v425
        %427 = vst.msk [vmem:[%s325] sm:$0xf] %vm404, %v426
        %p428 = scmp.lt.s32.totalorder %s27, 0
        %s429 = scalar_select %p428, %s27, 0
        %s430 = smul.addr %s429, 4
        %s431 = scalar_lea.vmem %s2, %s430
        %p432 = scmp.lt.s32.totalorder %s27, 0
        %s433 = scalar_select %p432, %s27, 0
        %s434 = smul.addr %s433, 4
        %s435 = scalar_lea.vmem %s3, %s434
        %p436 = scmp.lt.s32.totalorder %s27, 0
        %s437 = scalar_select %p436, %s27, 0
        %s438 = smul.addr %s437, 4
        %s439 = scalar_lea.vmem %s4, %s438
        // Predicated region
        $region41: #{tpu_custom_call.1} parent=27 // pred_check
          %p440 = pneg %p127
        $region42: #{tpu_custom_call.1} parent=27 // pred_check_branch
          %442 = sbr.rel (%p440) target = $region44
        $region43: #{tpu_custom_call.1} parent=27 // pred_region
          _
        $region44: #{tpu_custom_call.1} parent=27 // pred_fallthru
          _
        // Predicated region
        $region45: #{tpu_custom_call.1} parent=27 // pred_check
          %p443 = pneg %p153
        $region46: #{tpu_custom_call.1} parent=27 // pred_check_branch
          %445 = sbr.rel (%p443) target = $region48
        $region47: #{tpu_custom_call.1} parent=27 // pred_region
          _
        $region48: #{tpu_custom_call.1} parent=27 // pred_fallthru
          _
        // Predicated region
        $region49: #{tpu_custom_call.1} parent=27 // pred_check
          %p446 = pneg %p179
        $region50: #{tpu_custom_call.1} parent=27 // pred_check_branch
          %448 = sbr.rel (%p446) target = $region52
        $region51: #{tpu_custom_call.1} parent=27 // pred_region
          _
        $region52: #{tpu_custom_call.1} parent=27 // pred_fallthru
          _
        // Predicated region
        $region53: #{tpu_custom_call.1} parent=27 // pred_check
          %p449 = pneg %p127
        $region54: #{tpu_custom_call.1} parent=27 // pred_check_branch
          %451 = sbr.rel (%p449) target = $region56
        $region55: #{tpu_custom_call.1} parent=27 // pred_region
          %p452 = scmp.lt.s32.totalorder %s27, 0
          %s453 = scalar_select %p452, %s27, 0
          %s454 = smul.addr %s453, 4
          %s455 = scalar_lea.vmem %s2, %s454
        $region56: #{tpu_custom_call.1} parent=27 // pred_fallthru
          _
        // Predicated region
        $region57: #{tpu_custom_call.1} parent=27 // pred_check
          %p456 = pneg %p153
        $region58: #{tpu_custom_call.1} parent=27 // pred_check_branch
          %458 = sbr.rel (%p456) target = $region60
        $region59: #{tpu_custom_call.1} parent=27 // pred_region
          %p459 = scmp.lt.s32.totalorder %s27, 0
          %s460 = scalar_select %p459, %s27, 0
          %s461 = smul.addr %s460, 4
          %s462 = scalar_lea.vmem %s3, %s461
        $region60: #{tpu_custom_call.1} parent=27 // pred_fallthru
          _
        // Predicated region
        $region61: #{tpu_custom_call.1} parent=27 // pred_check
          %p463 = pneg %p179
        $region62: #{tpu_custom_call.1} parent=27 // pred_check_branch
          %465 = sbr.rel (%p463) target = $region64
        $region63: #{tpu_custom_call.1} parent=27 // pred_region
          %p466 = scmp.lt.s32.totalorder %s27, 0
          %s467 = scalar_select %p466, %s27, 0
          %s468 = smul.addr %s467, 4
          %s469 = scalar_lea.vmem %s4, %s468
        $region64: #{tpu_custom_call.1} parent=27 // pred_fallthru
          _
      $region28: #{tpu_custom_call.1} parent=5 // pred_fallthru
        _
      %p470 = scmp.le.s32.totalorder 2, %s17
      // Predicated region
      $region65: #{tpu_custom_call.1} parent=5 // pred_check
        %p471 = pneg %p470
      $region66: #{tpu_custom_call.1} parent=5 // pred_check_branch
        %473 = sbr.rel (%p471) target = $region68
      $region67: #{tpu_custom_call.1} parent=5 // pred_region
        %s474 = ssub.s32 %s17, 2
      $region68: #{tpu_custom_call.1} parent=5 // pred_fallthru
        _
    $region6: #{tpu_custom_call.1} parent=1 // loop_footer
      %s21 = sadd.s32 1, %s17
    $region7: #{tpu_custom_call.1} parent=1 // loop_footer_branch
      %16 = sbr.rel target = $region3
    $region8: #{tpu_custom_call.1} parent=1 // loop_exit
      _
    %475 = vsyncpa [#allocation3], 1
    %s476 = scalar_lea.sflag [#allocation3], 1
    %477 = vsyncpa %s476, 1
    %478 = vsyncpa [#allocation5], 1
    %s479 = scalar_lea.sflag [#allocation5], 1
    %480 = vsyncpa %s479, 1

</llo_original>
